<compile_context>
chip_gen: v7x
topology: tpu7x:2x2x1
jax: 0.10.0
libtpu: 0.0.40
codegen_flags: <defaults>
</compile_context>

<pallas_src>
import functools

import jax
import jax.numpy as jnp
from jax.experimental import pallas as pl
from jax.experimental.pallas import tpu as pltpu

NEG_SLOPE = 0.01  # torch.nn.LeakyReLU default


def _leaky(x):
    return jnp.where(x > 0, x, NEG_SLOPE * x)


def _round_up(n, m):
    return -(-n // m) * m


def _vmem_budget_bytes():
    """Generation-aware VMEM budget (leave headroom for Mosaic internal scratch)."""
    cap = None
    try:
        cap = int(pltpu.get_tpu_info().vmem_capacity_bytes)
    except Exception:
        cap = None
    if cap is None or cap <= 0:
        return 64 << 20                       # conservative, works everywhere
    if cap <= (64 << 20):                     # v7x-class: 64 MiB physical per TC
        return max(32 << 20, min(cap - (12 << 20), 52 << 20))
    return max(64 << 20, min(cap - (24 << 20), 112 << 20))   # v5e/v6e: 128 MiB physical


# -----------------------------------------------------------------------------
# Fused kernel: one grid step per batch, full (Cout, HWp) resident in VMEM.
#   y = LeakyReLU(BN1(conv1x1(x))); s = sigmoid(fc2(LeakyReLU(fc1(mean(y)))));
#   out = LeakyReLU(BN2(y * s)).
# -----------------------------------------------------------------------------
def _fused_kernel(x_ref, w_ref, a1_ref, c1_ref, w1_ref, b1_ref, w2_ref, b2_ref,
                  a2_ref, c2_ref, o_ref, *, inv_hw, hw_valid, needs_mask):
    x = x_ref[0].astype(jnp.bfloat16)                                   # (Cin, HWp)
    y = jnp.dot(w_ref[...], x, preferred_element_type=jnp.float32)      # (Cout, HWp) f32
    y = _leaky(y * a1_ref[...] + c1_ref[...])                           # conv bias + BN1 folded

    if needs_mask:  # static: HW was zero-padded up to a multiple of 128
        lane = jax.lax.broadcasted_iota(jnp.int32, y.shape, 1)
        ym = jnp.where(lane < hw_valid, y, 0.0)
    else:
        ym = y
    p = jnp.sum(ym, axis=1, keepdims=True) * inv_hw                     # (Cout, 1) global mean

    h = _leaky(jnp.dot(w1_ref[...], p, preferred_element_type=jnp.float32) + b1_ref[...])
    s = jax.nn.sigmoid(jnp.dot(w2_ref[...], h, preferred_element_type=jnp.float32) + b2_ref[...])
    scale = s * a2_ref[...]                                             # fold SE scale into BN2 scale

    o_ref[0] = _leaky(y * scale + c2_ref[...]).astype(o_ref.dtype)


# -----------------------------------------------------------------------------
# Tiled fallback, pass A: per-channel pooled sum of LeakyReLU(BN1(conv(x))).
# The pooled-sum output accumulates across the "arbitrary" spatial-tile axis.
# The padding mask is applied only on the last spatial tile.
# -----------------------------------------------------------------------------
def _pool_kernel(x_ref, w_ref, a1_ref, c1_ref, psum_ref, *, hw_valid, tile_hw, needs_mask):
    t = pl.program_id(1)

    x = x_ref[0].astype(jnp.bfloat16)                                   # (Cin, tHW)
    y = jnp.dot(w_ref[...], x, preferred_element_type=jnp.float32)      # (Cout, tHW)
    y = _leaky(y * a1_ref[...] + c1_ref[...])

    @pl.when(t == 0)
    def _():
        psum_ref[0] = jnp.zeros_like(psum_ref[0])

    if needs_mask:
        last = pl.num_programs(1) - 1

        @pl.when(t == last)
        def _():
            lane = jax.lax.broadcasted_iota(jnp.int32, y.shape, 1)
            ym = jnp.where(t * tile_hw + lane < hw_valid, y, 0.0)
            psum_ref[0] = psum_ref[0] + jnp.sum(ym, axis=1, keepdims=True)

        @pl.when(t != last)
        def _():
            psum_ref[0] = psum_ref[0] + jnp.sum(y, axis=1, keepdims=True)
    else:
        psum_ref[0] = psum_ref[0] + jnp.sum(y, axis=1, keepdims=True)


# -----------------------------------------------------------------------------
# Tiled fallback, pass B: recompute conv+BN1+LeakyReLU from x (no y intermediate
# in HBM), apply per-batch SE scale (precomputed in JAX), BN2 (folded), LeakyReLU.
# -----------------------------------------------------------------------------
def _apply_kernel(x_ref, w_ref, a1_ref, c1_ref, scale_ref, c2_ref, o_ref):
    x = x_ref[0].astype(jnp.bfloat16)                                   # (Cin, tHW)
    y = jnp.dot(w_ref[...], x, preferred_element_type=jnp.float32)      # (Cout, tHW)
    y = _leaky(y * a1_ref[...] + c1_ref[...])
    o_ref[0] = _leaky(y * scale_ref[0] + c2_ref[...]).astype(o_ref.dtype)


def conv2d_channel_forward(x_nchw, params, *, tile_hw=None, out_dtype=None,
                           eps=1e-5, force_tiled=False):
    """Forward pass of Conv2d_channel (inference-mode BatchNorm).

    x_nchw: (B, Cin, H, W), f32 or bf16 (bf16 input halves the dominant HBM read).
    Returns (B, Cout, H, W) in `out_dtype` (default: x dtype; pass jnp.bfloat16 to
    also halve the output writeback).
    """
    B, Cin, H, W = x_nchw.shape
    HW = H * W
    out_dtype = x_nchw.dtype if out_dtype is None else jnp.dtype(out_dtype)

    w_conv = params["w_conv"]                      # (Cout, Cin): 1x1 kernel squeezed
    Cout = w_conv.shape[0]
    w1 = params["fc1_w"]                           # (Cr, Cout)  (torch Linear layout)
    w2 = params["fc2_w"]                           # (Cout, Cr)
    Cr = w1.shape[0]

    f32 = jnp.float32
    col = lambda v: v.reshape(-1, 1).astype(f32)   # per-channel column (broadcasts over lanes)

    # Fold conv bias + BN1 (running stats) into one per-channel affine.
    a1 = params["bn1_gamma"] / jnp.sqrt(params["bn1_var"] + eps)
    c1 = (params["b_conv"] - params["bn1_mean"]) * a1 + params["bn1_beta"]
    # Fold the SE BatchNorm (running stats) into a per-channel affine.
    a2 = params["bn2_gamma"] / jnp.sqrt(params["bn2_var"] + eps)
    c2 = params["bn2_beta"] - params["bn2_mean"] * a2

    # Channels-first, flattened spatial: (B, C, HW).  Reshape only -- no data movement.
    x = x_nchw.reshape(B, Cin, HW)
    x_it = x.dtype.itemsize
    out_it = jnp.dtype(out_dtype).itemsize
    w_bf16 = w_conv.astype(jnp.bfloat16)

    sub = lambda n: _round_up(max(int(n), 1), 8)
    lane128 = lambda n: _round_up(max(int(n), 1), 128)

    budget = _vmem_budget_bytes()
    const_bytes = (sub(Cout) * lane128(Cin) * 2        # conv weight (bf16)
                   + sub(Cr) * lane128(Cout) * 4       # fc1 weight
                   + sub(Cout) * lane128(Cr) * 4       # fc2 weight
                   + 8 * sub(Cout) * 128 * 4)          # per-channel columns / biases (lane padded)

    hw128 = _round_up(HW, 128)

    # ----------------------------- fused path -----------------------------
    # Per-batch footprint if the full spatial extent is resident in VMEM.
    fused_bytes = (2 * sub(Cin) * hw128 * x_it         # x block (double-buffered)
                   + sub(Cin) * hw128 * 2              # bf16 cast of x
                   + 2 * sub(Cout) * hw128 * 4         # y (f32) + scaled temp
                   + 2 * sub(Cout) * hw128 * out_it    # output block (double-buffered)
                   + const_bytes)

    if not force_tiled and fused_bytes <= budget:
        xp = x if hw128 == HW else jnp.pad(x, ((0, 0), (0, 0), (0, hw128 - HW)))
        kernel = functools.partial(_fused_kernel, inv_hw=1.0 / HW, hw_valid=HW,
                                   needs_mask=(hw128 != HW))
        cst = lambda shape: pl.BlockSpec(shape, lambda b: (0, 0))
        out = pl.pallas_call(
            kernel,
            out_shape=jax.ShapeDtypeStruct((B, Cout, hw128), out_dtype),
            grid_spec=pltpu.PrefetchScalarGridSpec(
                num_scalar_prefetch=0,
                grid=(B,),
                in_specs=[
                    pl.BlockSpec((1, Cin, hw128), lambda b: (b, 0, 0)),
                    cst((Cout, Cin)),   # conv weight (bf16)
                    cst((Cout, 1)),     # BN1 scale (folded)
                    cst((Cout, 1)),     # BN1 shift (folded, incl. conv bias)
                    cst((Cr, Cout)),    # fc1 weight
                    cst((Cr, 1)),       # fc1 bias
                    cst((Cout, Cr)),    # fc2 weight
                    cst((Cout, 1)),     # fc2 bias
                    cst((Cout, 1)),     # BN2 scale (folded)
                    cst((Cout, 1)),     # BN2 shift (folded)
                ],
                out_specs=pl.BlockSpec((1, Cout, hw128), lambda b: (b, 0, 0)),
            ),
            compiler_params=pltpu.CompilerParams(
                dimension_semantics=("parallel",),
                vmem_limit_bytes=int(budget),
            ),
        )(xp, w_bf16, col(a1), col(c1), w1.astype(f32), col(params["fc1_b"]),
          w2.astype(f32), col(params["fc2_b"]), col(a2), col(c2))
        if hw128 != HW:
            out = out[:, :, :HW]
        return out.reshape(B, Cout, H, W)

    # --------------------------- tiled fallback ---------------------------
    # Adaptive spatial tile: aim for >= ~4 MiB of HBM traffic per grid step so the
    # ~0.35 us fixed per-step cost is amortized, capped by the VMEM budget.
    if tile_hw is None:
        traffic_per_lane = max(1, Cin * x_it + Cout * out_it)
        t_hw = max(2048, (4 << 20) // traffic_per_lane)
    else:
        t_hw = int(tile_hw)
    per_lane_vmem = (2 * sub(Cin) * x_it + sub(Cin) * 2    # x (double-buffered) + bf16 cast
                     + 2 * sub(Cout) * 4                   # y f32 (+ scaled temp)
                     + 2 * sub(Cout) * out_it)             # output (double-buffered)
    t_vmem_max = max(128, (budget - const_bytes) // per_lane_vmem)
    t_hw = min(t_hw, t_vmem_max, hw128)
    t_hw = max(128, (t_hw // 128) * 128)

    hw_pad = _round_up(HW, t_hw)
    n_t = hw_pad // t_hw
    if hw_pad != HW:
        x = jnp.pad(x, ((0, 0), (0, 0), (0, hw_pad - HW)))

    cst2 = lambda shape: pl.BlockSpec(shape, lambda b, t: (0, 0))

    # Pass A: pooled per-channel sum only (no y intermediate written to HBM).
    pool_kernel = functools.partial(_pool_kernel, hw_valid=HW, tile_hw=t_hw,
                                    needs_mask=(hw_pad != HW))
    psum = pl.pallas_call(
        pool_kernel,
        out_shape=jax.ShapeDtypeStruct((B, Cout, 1), jnp.float32),
        grid_spec=pltpu.PrefetchScalarGridSpec(
            num_scalar_prefetch=0,
            grid=(B, n_t),
            in_specs=[
                pl.BlockSpec((1, Cin, t_hw), lambda b, t: (b, 0, t)),
                cst2((Cout, Cin)),
                cst2((Cout, 1)),
                cst2((Cout, 1)),
            ],
            out_specs=pl.BlockSpec((1, Cout, 1), lambda b, t: (b, 0, 0)),
        ),
        compiler_params=pltpu.CompilerParams(
            dimension_semantics=("parallel", "arbitrary"),
            vmem_limit_bytes=int(budget),
        ),
    )(x, w_bf16, col(a1), col(c1))

    # SE excitation MLP hoisted to plain JAX on the tiny (B, Cout) pooled vector.
    p = psum[:, :, 0] * (1.0 / HW)                                     # (B, Cout)
    h = _leaky(p @ w1.astype(f32).T + params["fc1_b"].astype(f32))     # (B, Cr)
    s = jax.nn.sigmoid(h @ w2.astype(f32).T + params["fc2_b"].astype(f32))
    scale = (s * a2.astype(f32))[:, :, None]                           # (B, Cout, 1)

    # Pass B: recompute conv+BN1+LeakyReLU from x, apply SE scale, BN2, LeakyReLU.
    out = pl.pallas_call(
        _apply_kernel,
        out_shape=jax.ShapeDtypeStruct((B, Cout, hw_pad), out_dtype),
        grid_spec=pltpu.PrefetchScalarGridSpec(
            num_scalar_prefetch=0,
            grid=(B, n_t),
            in_specs=[
                pl.BlockSpec((1, Cin, t_hw), lambda b, t: (b, 0, t)),
                cst2((Cout, Cin)),
                cst2((Cout, 1)),
                cst2((Cout, 1)),
                pl.BlockSpec((1, Cout, 1), lambda b, t: (b, 0, 0)),    # per-batch SE*BN2 scale
                cst2((Cout, 1)),                                       # BN2 shift (folded)
            ],
            out_specs=pl.BlockSpec((1, Cout, t_hw), lambda b, t: (b, 0, t)),
        ),
        compiler_params=pltpu.CompilerParams(
            dimension_semantics=("parallel", "parallel"),
            vmem_limit_bytes=int(budget),
        ),
    )(x, w_bf16, col(a1), col(c1), scale, col(c2))

    if hw_pad != HW:
        out = out[:, :, :HW]
    return out.reshape(B, Cout, H, W)


# -----------------------------------------------------------------------------
# Pure-JAX f32 reference (matches the PyTorch module in eval mode).
# -----------------------------------------------------------------------------
def reference_forward(x_nchw, params, eps=1e-5):
    def bn(v, gamma, beta, mean, var):
        return ((v - mean[None, :, None, None])
                / jnp.sqrt(var[None, :, None, None] + eps)
                * gamma[None, :, None, None] + beta[None, :, None, None])

    y = jnp.einsum("bchw,oc->bohw", x_nchw, params["w_conv"]) \
        + params["b_conv"][None, :, None, None]
    y = bn(y, params["bn1_gamma"], params["bn1_beta"],
           params["bn1_mean"], params["bn1_var"])
    y = _leaky(y)

    p = jnp.mean(y, axis=(2, 3))                                   # (B, Cout)
    h = _leaky(p @ params["fc1_w"].T + params["fc1_b"])
    s = jax.nn.sigmoid(h @ params["fc2_w"].T + params["fc2_b"])    # (B, Cout)
    z = y * s[:, :, None, None]
    z = bn(z, params["bn2_gamma"], params["bn2_beta"],
           params["bn2_mean"], params["bn2_var"])
    return _leaky(z)


def make_params(key, num_in_filters, num_out_filters):
    Cin, Cout = num_in_filters, num_out_filters
    Cr = Cout // 8
    ks = jax.random.split(key, 12)
    return {
        "w_conv": jax.random.normal(ks[0], (Cout, Cin), jnp.float32) * 0.1,
        "b_conv": jax.random.normal(ks[1], (Cout,), jnp.float32) * 0.1,
        "bn1_gamma": 1.0 + 0.1 * jax.random.normal(ks[2], (Cout,), jnp.float32),
        "bn1_beta": 0.1 * jax.random.normal(ks[3], (Cout,), jnp.float32),
        "bn1_mean": 0.05 * jax.random.normal(ks[4], (Cout,), jnp.float32),
        "bn1_var": 0.5 + jnp.abs(jax.random.normal(ks[5], (Cout,), jnp.float32)) * 0.1,
        "fc1_w": jax.random.normal(ks[6], (Cr, Cout), jnp.float32) * 0.2,
        "fc1_b": jax.random.normal(ks[7], (Cr,), jnp.float32) * 0.1,
        "fc2_w": jax.random.normal(ks[8], (Cout, Cr), jnp.float32) * 0.2,
        "fc2_b": jax.random.normal(ks[9], (Cout,), jnp.float32) * 0.1,
        "bn2_gamma": 1.0 + 0.1 * jax.random.normal(ks[10], (Cout,), jnp.float32),
        "bn2_beta": 0.1 * jax.random.normal(ks[11], (Cout,), jnp.float32),
        "bn2_mean": jnp.zeros((Cout,), jnp.float32),
        "bn2_var": jnp.ones((Cout,), jnp.float32),
    }


if __name__ == "__main__":
    key = jax.random.PRNGKey(0)
    k_x, k_p, k_x2 = jax.random.split(key, 3)

    B, Cin, H, W = 2, 16, 16, 16
    Cout = 32                           # SE reduction ratio 8 -> Cr = 4

    x = jax.random.normal(k_x, (B, Cin, H, W), jnp.float32)
    params = make_params(k_p, Cin, Cout)

    # 1) Fused single-call path (no HBM intermediate).
    fwd = jax.jit(conv2d_channel_forward)
    out = fwd(x, params)
    jax.block_until_ready(out)
    assert out.shape == (B, Cout, H, W), out.shape
    ref = reference_forward(x, params)
    err = float(jnp.max(jnp.abs(out.astype(jnp.float32) - ref)))
    assert err < 0.1, err

    # 2) Same fused path with lane padding (HW not a multiple of 128).
    H2 = W2 = 12                        # HW = 144 -> padded to 256
    x2 = jax.random.normal(k_x2, (B, Cin, H2, W2), jnp.float32)
    out2 = jax.jit(conv2d_channel_forward)(x2, params)
    jax.block_until_ready(out2)
    ref2 = reference_forward(x2, params)
    err2 = float(jnp.max(jnp.abs(out2.astype(jnp.float32) - ref2)))
    assert err2 < 0.1, err2

    # 3) Tiled fallback (pool pass + hoisted SE MLP + recompute pass), forced with a
    #    small tile so the multi-tile accumulation and last-tile masking are exercised.
    fwd_t = jax.jit(functools.partial(conv2d_channel_forward,
                                      force_tiled=True, tile_hw=128))
    out3 = fwd_t(x2, params)
    jax.block_until_ready(out3)
    err3 = float(jnp.max(jnp.abs(out3.astype(jnp.float32) - ref2)))
    assert err3 < 0.1, err3

    print("KERNEL_OK")
</pallas_src>

<mosaic_0001>
module attributes {stable_mosaic.version = 11 : i64} {
  func.func @_fused_kernel(%arg0: i32, %arg1: memref<1x16x256xf32, #tpu.memory_space<vmem>>, %arg2: memref<32x16xbf16, #tpu.memory_space<vmem>>, %arg3: memref<32x1xf32, #tpu.memory_space<vmem>>, %arg4: memref<32x1xf32, #tpu.memory_space<vmem>>, %arg5: memref<4x32xf32, #tpu.memory_space<vmem>>, %arg6: memref<4x1xf32, #tpu.memory_space<vmem>>, %arg7: memref<32x4xf32, #tpu.memory_space<vmem>>, %arg8: memref<32x1xf32, #tpu.memory_space<vmem>>, %arg9: memref<32x1xf32, #tpu.memory_space<vmem>>, %arg10: memref<32x1xf32, #tpu.memory_space<vmem>>, %arg11: memref<1x32x256xf32, #tpu.memory_space<vmem>>) attributes {dimension_semantics = [#tpu.dimension_semantics<parallel>], iteration_bounds = array<i64: 2>, scalar_prefetch = 0 : i64, scratch_operands = 0 : i64, tpu.core_type = #tpu.core_type<tc>, window_params = [{transform_indices = @transform_0, window_bounds = array<i64: 1, 16, 256>}, {pipeline_mode = #tpu.pipeline_mode<synchronous>, transform_indices = @transform_1, window_bounds = array<i64: 32, 16>}, {pipeline_mode = #tpu.pipeline_mode<synchronous>, transform_indices = @transform_2, window_bounds = array<i64: 32, 1>}, {pipeline_mode = #tpu.pipeline_mode<synchronous>, transform_indices = @transform_3, window_bounds = array<i64: 32, 1>}, {pipeline_mode = #tpu.pipeline_mode<synchronous>, transform_indices = @transform_4, window_bounds = array<i64: 4, 32>}, {pipeline_mode = #tpu.pipeline_mode<synchronous>, transform_indices = @transform_5, window_bounds = array<i64: 4, 1>}, {pipeline_mode = #tpu.pipeline_mode<synchronous>, transform_indices = @transform_6, window_bounds = array<i64: 32, 4>}, {pipeline_mode = #tpu.pipeline_mode<synchronous>, transform_indices = @transform_7, window_bounds = array<i64: 32, 1>}, {pipeline_mode = #tpu.pipeline_mode<synchronous>, transform_indices = @transform_8, window_bounds = array<i64: 32, 1>}, {pipeline_mode = #tpu.pipeline_mode<synchronous>, transform_indices = @transform_9, window_bounds = array<i64: 32, 1>}, {transform_indices = @transform_10, window_bounds = array<i64: 1, 32, 256>}]} {
    %c0 = arith.constant 0 : index
    %c0_0 = arith.constant 0 : index
    %c0_1 = arith.constant 0 : index
    %0 = vector.load %arg1[%c0, %c0_0, %c0_1] : memref<1x16x256xf32, #tpu.memory_space<vmem>>, vector<1x16x256xf32>
    %1 = vector.shape_cast %0 : vector<1x16x256xf32> to vector<16x256xf32>
    %2 = arith.truncf %1 : vector<16x256xf32> to vector<16x256xbf16>
    %c0_2 = arith.constant 0 : index
    %c0_3 = arith.constant 0 : index
    %3 = vector.load %arg2[%c0_2, %c0_3] : memref<32x16xbf16, #tpu.memory_space<vmem>>, vector<32x16xbf16>
    %cst = arith.constant dense<0.000000e+00> : vector<32x256xf32>
    %4 = tpu.matmul %3, %2, %cst {dimension_numbers = #tpu.dot_dimension_numbers<[1], [0], [0], [1], [0, 0, 1, 1], [], []>} : vector<32x16xbf16>, vector<16x256xbf16>, vector<32x256xf32> -> vector<32x256xf32>
    %c0_4 = arith.constant 0 : index
    %c0_5 = arith.constant 0 : index
    %5 = vector.load %arg3[%c0_4, %c0_5] : memref<32x1xf32, #tpu.memory_space<vmem>>, vector<32x1xf32>
    %6 = vector.broadcast %5 : vector<32x1xf32> to vector<32x256xf32>
    %7 = arith.mulf %4, %6 : vector<32x256xf32>
    %c0_6 = arith.constant 0 : index
    %c0_7 = arith.constant 0 : index
    %8 = vector.load %arg4[%c0_6, %c0_7] : memref<32x1xf32, #tpu.memory_space<vmem>>, vector<32x1xf32>
    %9 = vector.broadcast %8 : vector<32x1xf32> to vector<32x256xf32>
    %10 = arith.addf %7, %9 : vector<32x256xf32>
    %cst_8 = arith.constant 0.000000e+00 : f32
    %11 = vector.broadcast %cst_8 : f32 to vector<32x256xf32>
    %12 = arith.cmpf ogt, %10, %11 : vector<32x256xf32>
    %cst_9 = arith.constant 0.00999999977 : f32
    %13 = vector.broadcast %cst_9 : f32 to vector<32x256xf32>
    %14 = arith.mulf %13, %10 : vector<32x256xf32>
    %15 = arith.select %12, %10, %14 : vector<32x256xi1>, vector<32x256xf32>
    %cst_10 = arith.constant dense<0.000000e+00> : vector<32xf32>
    %16 = vector.multi_reduction <add>, %15, %cst_10 [1] : vector<32x256xf32> to vector<32xf32>
    %17 = vector.shape_cast %16 : vector<32xf32> to vector<32x1xf32>
    %cst_11 = arith.constant 3.906250e-03 : f32
    %18 = vector.broadcast %cst_11 : f32 to vector<32x1xf32>
    %19 = arith.mulf %17, %18 : vector<32x1xf32>
    %c0_12 = arith.constant 0 : index
    %c0_13 = arith.constant 0 : index
    %20 = vector.load %arg5[%c0_12, %c0_13] : memref<4x32xf32, #tpu.memory_space<vmem>>, vector<4x32xf32>
    %cst_14 = arith.constant dense<0.000000e+00> : vector<4x1xf32>
    %21 = tpu.matmul %20, %19, %cst_14 {dimension_numbers = #tpu.dot_dimension_numbers<[1], [0], [0], [1], [0, 0, 1, 1], [], []>} : vector<4x32xf32>, vector<32x1xf32>, vector<4x1xf32> -> vector<4x1xf32>
    %c0_15 = arith.constant 0 : index
    %c0_16 = arith.constant 0 : index
    %22 = vector.load %arg6[%c0_15, %c0_16] : memref<4x1xf32, #tpu.memory_space<vmem>>, vector<4x1xf32>
    %23 = arith.addf %21, %22 : vector<4x1xf32>
    %cst_17 = arith.constant 0.000000e+00 : f32
    %24 = vector.broadcast %cst_17 : f32 to vector<4x1xf32>
    %25 = arith.cmpf ogt, %23, %24 : vector<4x1xf32>
    %cst_18 = arith.constant 0.00999999977 : f32
    %26 = vector.broadcast %cst_18 : f32 to vector<4x1xf32>
    %27 = arith.mulf %26, %23 : vector<4x1xf32>
    %28 = arith.select %25, %23, %27 : vector<4x1xi1>, vector<4x1xf32>
    %c0_19 = arith.constant 0 : index
    %c0_20 = arith.constant 0 : index
    %29 = vector.load %arg7[%c0_19, %c0_20] : memref<32x4xf32, #tpu.memory_space<vmem>>, vector<32x4xf32>
    %cst_21 = arith.constant dense<0.000000e+00> : vector<32x1xf32>
    %30 = tpu.matmul %29, %28, %cst_21 {dimension_numbers = #tpu.dot_dimension_numbers<[1], [0], [0], [1], [0, 0, 1, 1], [], []>} : vector<32x4xf32>, vector<4x1xf32>, vector<32x1xf32> -> vector<32x1xf32>
    %c0_22 = arith.constant 0 : index
    %c0_23 = arith.constant 0 : index
    %31 = vector.load %arg8[%c0_22, %c0_23] : memref<32x1xf32, #tpu.memory_space<vmem>>, vector<32x1xf32>
    %32 = arith.addf %30, %31 : vector<32x1xf32>
    %33 = arith.negf %32 : vector<32x1xf32>
    %34 = math.exp %33 : vector<32x1xf32>
    %cst_24 = arith.constant 1.000000e+00 : f32
    %35 = vector.broadcast %cst_24 : f32 to vector<32x1xf32>
    %36 = arith.addf %35, %34 : vector<32x1xf32>
    %37 = arith.divf %35, %36 : vector<32x1xf32>
    %c0_25 = arith.constant 0 : index
    %c0_26 = arith.constant 0 : index
    %38 = vector.load %arg9[%c0_25, %c0_26] : memref<32x1xf32, #tpu.memory_space<vmem>>, vector<32x1xf32>
    %39 = arith.mulf %37, %38 : vector<32x1xf32>
    %40 = vector.broadcast %39 : vector<32x1xf32> to vector<32x256xf32>
    %41 = arith.mulf %15, %40 : vector<32x256xf32>
    %c0_27 = arith.constant 0 : index
    %c0_28 = arith.constant 0 : index
    %42 = vector.load %arg10[%c0_27, %c0_28] : memref<32x1xf32, #tpu.memory_space<vmem>>, vector<32x1xf32>
    %43 = vector.broadcast %42 : vector<32x1xf32> to vector<32x256xf32>
    %44 = arith.addf %41, %43 : vector<32x256xf32>
    %cst_29 = arith.constant 0.000000e+00 : f32
    %45 = vector.broadcast %cst_29 : f32 to vector<32x256xf32>
    %46 = arith.cmpf ogt, %44, %45 : vector<32x256xf32>
    %cst_30 = arith.constant 0.00999999977 : f32
    %47 = vector.broadcast %cst_30 : f32 to vector<32x256xf32>
    %48 = arith.mulf %47, %44 : vector<32x256xf32>
    %49 = arith.select %46, %44, %48 : vector<32x256xi1>, vector<32x256xf32>
    %c0_31 = arith.constant 0 : index
    %c0_32 = arith.constant 0 : index
    %c0_33 = arith.constant 0 : index
    %50 = vector.load %arg11[%c0_31, %c0_32, %c0_33] : memref<1x32x256xf32, #tpu.memory_space<vmem>>, vector<1x32x256xf32>
    %51 = vector.shape_cast %50 : vector<1x32x256xf32> to vector<32x256xf32>
    %52 = vector.shape_cast %49 : vector<32x256xf32> to vector<1x32x256xf32>
    tpu.vector_store %arg11[%c0_31, %c0_32, %c0_33], %52 {strides = array<i32>} : memref<1x32x256xf32, #tpu.memory_space<vmem>>, vector<1x32x256xf32>,
    return
  }
  func.func @transform_0(%arg0: i32) -> (i32, i32, i32) {
    %c0_i32 = arith.constant 0 : i32
    %c0_i32_0 = arith.constant 0 : i32
    %c0_i32_1 = arith.constant 0 : i32
    return %arg0, %c0_i32, %c0_i32_0 : i32, i32, i32
  }
  func.func @transform_1(%arg0: i32) -> (i32, i32) {
    %c0_i32 = arith.constant 0 : i32
    %c0_i32_0 = arith.constant 0 : i32
    %c0_i32_1 = arith.constant 0 : i32
    return %c0_i32, %c0_i32_0 : i32, i32
  }
  func.func @transform_2(%arg0: i32) -> (i32, i32) {
    %c0_i32 = arith.constant 0 : i32
    %c0_i32_0 = arith.constant 0 : i32
    %c0_i32_1 = arith.constant 0 : i32
    return %c0_i32, %c0_i32_0 : i32, i32
  }
  func.func @transform_3(%arg0: i32) -> (i32, i32) {
    %c0_i32 = arith.constant 0 : i32
    %c0_i32_0 = arith.constant 0 : i32
    %c0_i32_1 = arith.constant 0 : i32
    return %c0_i32, %c0_i32_0 : i32, i32
  }
  func.func @transform_4(%arg0: i32) -> (i32, i32) {
    %c0_i32 = arith.constant 0 : i32
    %c0_i32_0 = arith.constant 0 : i32
    %c0_i32_1 = arith.constant 0 : i32
    return %c0_i32, %c0_i32_0 : i32, i32
  }
  func.func @transform_5(%arg0: i32) -> (i32, i32) {
    %c0_i32 = arith.constant 0 : i32
    %c0_i32_0 = arith.constant 0 : i32
    %c0_i32_1 = arith.constant 0 : i32
    return %c0_i32, %c0_i32_0 : i32, i32
  }
  func.func @transform_6(%arg0: i32) -> (i32, i32) {
    %c0_i32 = arith.constant 0 : i32
    %c0_i32_0 = arith.constant 0 : i32
    %c0_i32_1 = arith.constant 0 : i32
    return %c0_i32, %c0_i32_0 : i32, i32
  }
  func.func @transform_7(%arg0: i32) -> (i32, i32) {
    %c0_i32 = arith.constant 0 : i32
    %c0_i32_0 = arith.constant 0 : i32
    %c0_i32_1 = arith.constant 0 : i32
    return %c0_i32, %c0_i32_0 : i32, i32
  }
  func.func @transform_8(%arg0: i32) -> (i32, i32) {
    %c0_i32 = arith.constant 0 : i32
    %c0_i32_0 = arith.constant 0 : i32
    %c0_i32_1 = arith.constant 0 : i32
    return %c0_i32, %c0_i32_0 : i32, i32
  }
  func.func @transform_9(%arg0: i32) -> (i32, i32) {
    %c0_i32 = arith.constant 0 : i32
    %c0_i32_0 = arith.constant 0 : i32
    %c0_i32_1 = arith.constant 0 : i32
    return %c0_i32, %c0_i32_0 : i32, i32
  }
  func.func @transform_10(%arg0: i32) -> (i32, i32, i32) {
    %c0_i32 = arith.constant 0 : i32
    %c0_i32_0 = arith.constant 0 : i32
    %c0_i32_1 = arith.constant 0 : i32
    return %arg0, %c0_i32, %c0_i32_0 : i32, i32, i32
  }
}

</mosaic_0001>

<llo_original>
// kernel: conv2d_channel_forward.1
$region0: #{conv2d_channel_forward.1}
  #allocation0 [shape = 'u32[]', space=smem, size = 0x4, offset = 0x4, fixed_abs, tag = 'smem constant byte address 0x4 - core index']
  #allocation1 [shape = 'u32[144,128]{1,0:T(1,128)}', space=vmem, size = 0x12000, scoped, tag = 'internal scratch']
  %s0 = inlined_call_operand.hbm [shape: f32[2,16,256], index: 0, kind: input, shape index: {}]
  %s1 = inlined_call_operand.hbm [shape: bf16[32,16], index: 1, kind: input, shape index: {}]
  %s2 = inlined_call_operand.hbm [shape: f32[32,1], index: 2, kind: input, shape index: {}]
  %s3 = inlined_call_operand.hbm [shape: f32[32,1], index: 3, kind: input, shape index: {}]
  %s4 = inlined_call_operand.hbm [shape: f32[4,32], index: 4, kind: input, shape index: {}]
  %s5 = inlined_call_operand.hbm [shape: f32[4,1], index: 5, kind: input, shape index: {}]
  %s6 = inlined_call_operand.hbm [shape: f32[32,4], index: 6, kind: input, shape index: {}]
  %s7 = inlined_call_operand.hbm [shape: f32[32,1], index: 7, kind: input, shape index: {}]
  %s8 = inlined_call_operand.hbm [shape: f32[32,1], index: 8, kind: input, shape index: {}]
  %s9 = inlined_call_operand.hbm [shape: f32[32,1], index: 9, kind: input, shape index: {}]
  %s10 = inlined_call_operand.hbm [shape: f32[2,32,256], index: 10, kind: output, shape index: {}]
  %s11 = sld [smem:[#allocation0]]
  $region113: #{conv2d_channel_forward.1} parent=0
    _
  %s13 = ssub.s32 1, %s11
  %s14 = scalar_select 0, %s13, %s11
  $region1: #{conv2d_channel_forward.1} parent=0
    #allocation2 [shape = 'u8[32768]{0}', space=vmem, size = 0x8000, scoped, tag = 'input window, operand 0']
    #allocation3 [shape = 's32[2]{0}', space=sflag, size = 0x8, scoped, tag = 'scoped memory for conv2d_channel_forward.1']
    #allocation4 [shape = 's32[2]{0}', space=sflag, size = 0x8, scoped, tag = 'scoped memory for conv2d_channel_forward.1']
    #allocation5 [shape = 'u8[8192]{0}', space=vmem, size = 0x2000, scoped, tag = 'input window, operand 1, single buffered']
    #allocation6 [shape = 's32[1]{0}', space=sflag, size = 0x4, scoped, tag = 'scoped memory for conv2d_channel_forward.1']
    #allocation7 [shape = 'u8[16384]{0}', space=vmem, size = 0x4000, scoped, tag = 'input window, operand 2, single buffered']
    #allocation8 [shape = 'u8[16384]{0}', space=vmem, size = 0x4000, scoped, tag = 'input window, operand 3, single buffered']
    #allocation9 [shape = 's32[1]{0}', space=sflag, size = 0x4, scoped, tag = 'scoped memory for conv2d_channel_forward.1']
    #allocation10 [shape = 'u8[2048]{0}', space=vmem, size = 0x800, scoped, tag = 'input window, operand 4, single buffered']
    #allocation11 [shape = 'u8[2048]{0}', space=vmem, size = 0x800, scoped, tag = 'input window, operand 5, single buffered']
    #allocation12 [shape = 's32[1]{0}', space=sflag, size = 0x4, scoped, tag = 'scoped memory for conv2d_channel_forward.1']
    #allocation13 [shape = 'u8[16384]{0}', space=vmem, size = 0x4000, scoped, tag = 'input window, operand 6, single buffered']
    #allocation14 [shape = 'u8[16384]{0}', space=vmem, size = 0x4000, scoped, tag = 'input window, operand 7, single buffered']
    #allocation15 [shape = 's32[1]{0}', space=sflag, size = 0x4, scoped, tag = 'scoped memory for conv2d_channel_forward.1']
    #allocation16 [shape = 'u8[16384]{0}', space=vmem, size = 0x4000, scoped, tag = 'input window, operand 8, single buffered']
    #allocation17 [shape = 'u8[16384]{0}', space=vmem, size = 0x4000, scoped, tag = 'input window, operand 9, single buffered']
    #allocation18 [shape = 's32[1]{0}', space=sflag, size = 0x4, scoped, tag = 'scoped memory for conv2d_channel_forward.1']
    #allocation19 [shape = 'u8[65536]{0}', space=vmem, size = 0x10000, scoped, tag = 'output window, operand 0']
    %15 = vsyncpa [#allocation3], 0
    %s16 = scalar_lea.sflag [#allocation3], 1
    %17 = vsyncpa %s16, 0
    %18 = vsyncpa [#allocation6], 0
    %19 = vsyncpa [#allocation9], 0
    %20 = vsyncpa [#allocation12], 0
    %21 = vsyncpa [#allocation15], 0
    %22 = vsyncpa [#allocation18], 0
    %23 = vsyncpa [#allocation4], 0
    %s24 = scalar_lea.sflag [#allocation4], 1
    %25 = vsyncpa %s24, 0
    loop: start=0, step=1, limit=4
    $region2: #{conv2d_channel_forward.1} parent=1 // loop_pre_header
      _
    $region3: #{conv2d_channel_forward.1} parent=1 // loop_header
      %s27 = sphi 0, %s31
      %p28 = scmp.ge.s32.totalorder %s27, 4
      %s37 = sphi 0, %s39
      %s40 = sphi 0, %s37
      %s41 = sphi 0, %s40
      %s57 = sphi 0, %s41
      %s61 = sphi 0, %s61
      %s63 = sphi 0, %s61
      %s64 = sphi 0, %s63
      %s78 = sphi 0, %s64
      %s82 = sphi 0, %s82
      %s84 = sphi 0, %s82
      %s85 = sphi 0, %s84
      %s99 = sphi 0, %s85
      %s103 = sphi 0, %s103
      %s105 = sphi 0, %s103
      %s106 = sphi 0, %s105
      %s120 = sphi 0, %s106
      %s124 = sphi 0, %s124
      %s126 = sphi 0, %s124
      %s127 = sphi 0, %s126
      %s141 = sphi 0, %s127
      %s145 = sphi 0, %s145
      %s147 = sphi 0, %s145
      %s148 = sphi 0, %s147
      %s162 = sphi 0, %s148
      %s166 = sphi 0, %s166
      %s168 = sphi 0, %s166
      %s169 = sphi 0, %s168
      %s183 = sphi 0, %s169
      %s187 = sphi 0, %s187
      %s189 = sphi 0, %s187
      %s190 = sphi 0, %s189
      %s204 = sphi 0, %s190
      %s208 = sphi 0, %s208
      %s210 = sphi 0, %s208
      %s211 = sphi 0, %s210
      %s225 = sphi 0, %s211
      %s229 = sphi 0, %s229
      %s231 = sphi 0, %s229
      %s232 = sphi 0, %s231
      %s246 = sphi 0, %s232
      %s252 = sphi 0, %s254
      %s255 = sphi 0, %s252
      %s256 = sphi 0, %s255
      %s272 = sphi 0, %s256
    $region4: #{conv2d_channel_forward.1} parent=1 // loop_header_branch
      %30 = sbr.rel (%p28) target = $region8
    $region5: #{conv2d_channel_forward.1} parent=1 // loop_body
      %s32 = ssub.s32 %s27, 1
      %s33 = ssub.s32 %s27, 2
      %s34 = sadd.s32 %s27, 1
      %s35 = ssub.s32 %s27, %s34
      %p36 = scmp.eq.s32.totalorder %s35, 0
      %s38 = sadd.s32 %s37, 1
      %s39 = scalar_select %p36, %s37, %s38
      %p42 = pneg %p36
      %p43 = scmp.eq.s32.totalorder %s27, 1
      %p44 = por %p42, %p43
      %p45 = scmp.ne.s32.totalorder %s37, %s40
      %p46 = scmp.eq.s32.totalorder %s27, 0
      %p47 = por %p45, %p46
      %p48 = scmp.ne.s32.totalorder %s37, %s40
      %p49 = scmp.eq.s32.totalorder %s32, 1
      %p50 = por %p48, %p49
      %p51 = scmp.ne.s32.totalorder %s40, %s41
      %p52 = scmp.eq.s32.totalorder %s32, 0
      %p53 = por %p51, %p52
      %p54 = scmp.ne.s32.totalorder %s40, %s41
      %p55 = scmp.eq.s32.totalorder %s33, 1
      %p56 = por %p54, %p55
      %p58 = scmp.ne.s32.totalorder %s41, %s57
      %p59 = scmp.eq.s32.totalorder %s33, 0
      %p60 = por %p58, %p59
      %s62 = sadd.s32 %s61, 1
      %p65 = scmp.eq.s32.totalorder %s27, 1
      %p66 = scmp.ne.s32.totalorder %s61, %s63
      %p67 = scmp.eq.s32.totalorder %s27, 0
      %p68 = por %p66, %p67
      %p69 = scmp.ne.s32.totalorder %s61, %s63
      %p70 = scmp.eq.s32.totalorder %s32, 1
      %p71 = por %p69, %p70
      %p72 = scmp.ne.s32.totalorder %s63, %s64
      %p73 = scmp.eq.s32.totalorder %s32, 0
      %p74 = por %p72, %p73
      %p75 = scmp.ne.s32.totalorder %s63, %s64
      %p76 = scmp.eq.s32.totalorder %s33, 1
      %p77 = por %p75, %p76
      %p79 = scmp.ne.s32.totalorder %s64, %s78
      %p80 = scmp.eq.s32.totalorder %s33, 0
      %p81 = por %p79, %p80
      %s83 = sadd.s32 %s82, 1
      %p86 = scmp.eq.s32.totalorder %s27, 1
      %p87 = scmp.ne.s32.totalorder %s82, %s84
      %p88 = scmp.eq.s32.totalorder %s27, 0
      %p89 = por %p87, %p88
      %p90 = scmp.ne.s32.totalorder %s82, %s84
      %p91 = scmp.eq.s32.totalorder %s32, 1
      %p92 = por %p90, %p91
      %p93 = scmp.ne.s32.totalorder %s84, %s85
      %p94 = scmp.eq.s32.totalorder %s32, 0
      %p95 = por %p93, %p94
      %p96 = scmp.ne.s32.totalorder %s84, %s85
      %p97 = scmp.eq.s32.totalorder %s33, 1
      %p98 = por %p96, %p97
      %p100 = scmp.ne.s32.totalorder %s85, %s99
      %p101 = scmp.eq.s32.totalorder %s33, 0
      %p102 = por %p100, %p101
      %s104 = sadd.s32 %s103, 1
      %p107 = scmp.eq.s32.totalorder %s27, 1
      %p108 = scmp.ne.s32.totalorder %s103, %s105
      %p109 = scmp.eq.s32.totalorder %s27, 0
      %p110 = por %p108, %p109
      %p111 = scmp.ne.s32.totalorder %s103, %s105
      %p112 = scmp.eq.s32.totalorder %s32, 1
      %p113 = por %p111, %p112
      %p114 = scmp.ne.s32.totalorder %s105, %s106
      %p115 = scmp.eq.s32.totalorder %s32, 0
      %p116 = por %p114, %p115
      %p117 = scmp.ne.s32.totalorder %s105, %s106
      %p118 = scmp.eq.s32.totalorder %s33, 1
      %p119 = por %p117, %p118
      %p121 = scmp.ne.s32.totalorder %s106, %s120
      %p122 = scmp.eq.s32.totalorder %s33, 0
      %p123 = por %p121, %p122
      %s125 = sadd.s32 %s124, 1
      %p128 = scmp.eq.s32.totalorder %s27, 1
      %p129 = scmp.ne.s32.totalorder %s124, %s126
      %p130 = scmp.eq.s32.totalorder %s27, 0
      %p131 = por %p129, %p130
      %p132 = scmp.ne.s32.totalorder %s124, %s126
      %p133 = scmp.eq.s32.totalorder %s32, 1
      %p134 = por %p132, %p133
      %p135 = scmp.ne.s32.totalorder %s126, %s127
      %p136 = scmp.eq.s32.totalorder %s32, 0
      %p137 = por %p135, %p136
      %p138 = scmp.ne.s32.totalorder %s126, %s127
      %p139 = scmp.eq.s32.totalorder %s33, 1
      %p140 = por %p138, %p139
      %p142 = scmp.ne.s32.totalorder %s127, %s141
      %p143 = scmp.eq.s32.totalorder %s33, 0
      %p144 = por %p142, %p143
      %s146 = sadd.s32 %s145, 1
      %p149 = scmp.eq.s32.totalorder %s27, 1
      %p150 = scmp.ne.s32.totalorder %s145, %s147
      %p151 = scmp.eq.s32.totalorder %s27, 0
      %p152 = por %p150, %p151
      %p153 = scmp.ne.s32.totalorder %s145, %s147
      %p154 = scmp.eq.s32.totalorder %s32, 1
      %p155 = por %p153, %p154
      %p156 = scmp.ne.s32.totalorder %s147, %s148
      %p157 = scmp.eq.s32.totalorder %s32, 0
      %p158 = por %p156, %p157
      %p159 = scmp.ne.s32.totalorder %s147, %s148
      %p160 = scmp.eq.s32.totalorder %s33, 1
      %p161 = por %p159, %p160
      %p163 = scmp.ne.s32.totalorder %s148, %s162
      %p164 = scmp.eq.s32.totalorder %s33, 0
      %p165 = por %p163, %p164
      %s167 = sadd.s32 %s166, 1
      %p170 = scmp.eq.s32.totalorder %s27, 1
      %p171 = scmp.ne.s32.totalorder %s166, %s168
      %p172 = scmp.eq.s32.totalorder %s27, 0
      %p173 = por %p171, %p172
      %p174 = scmp.ne.s32.totalorder %s166, %s168
      %p175 = scmp.eq.s32.totalorder %s32, 1
      %p176 = por %p174, %p175
      %p177 = scmp.ne.s32.totalorder %s168, %s169
      %p178 = scmp.eq.s32.totalorder %s32, 0
      %p179 = por %p177, %p178
      %p180 = scmp.ne.s32.totalorder %s168, %s169
      %p181 = scmp.eq.s32.totalorder %s33, 1
      %p182 = por %p180, %p181
      %p184 = scmp.ne.s32.totalorder %s169, %s183
      %p185 = scmp.eq.s32.totalorder %s33, 0
      %p186 = por %p184, %p185
      %s188 = sadd.s32 %s187, 1
      %p191 = scmp.eq.s32.totalorder %s27, 1
      %p192 = scmp.ne.s32.totalorder %s187, %s189
      %p193 = scmp.eq.s32.totalorder %s27, 0
      %p194 = por %p192, %p193
      %p195 = scmp.ne.s32.totalorder %s187, %s189
      %p196 = scmp.eq.s32.totalorder %s32, 1
      %p197 = por %p195, %p196
      %p198 = scmp.ne.s32.totalorder %s189, %s190
      %p199 = scmp.eq.s32.totalorder %s32, 0
      %p200 = por %p198, %p199
      %p201 = scmp.ne.s32.totalorder %s189, %s190
      %p202 = scmp.eq.s32.totalorder %s33, 1
      %p203 = por %p201, %p202
      %p205 = scmp.ne.s32.totalorder %s190, %s204
      %p206 = scmp.eq.s32.totalorder %s33, 0
      %p207 = por %p205, %p206
      %s209 = sadd.s32 %s208, 1
      %p212 = scmp.eq.s32.totalorder %s27, 1
      %p213 = scmp.ne.s32.totalorder %s208, %s210
      %p214 = scmp.eq.s32.totalorder %s27, 0
      %p215 = por %p213, %p214
      %p216 = scmp.ne.s32.totalorder %s208, %s210
      %p217 = scmp.eq.s32.totalorder %s32, 1
      %p218 = por %p216, %p217
      %p219 = scmp.ne.s32.totalorder %s210, %s211
      %p220 = scmp.eq.s32.totalorder %s32, 0
      %p221 = por %p219, %p220
      %p222 = scmp.ne.s32.totalorder %s210, %s211
      %p223 = scmp.eq.s32.totalorder %s33, 1
      %p224 = por %p222, %p223
      %p226 = scmp.ne.s32.totalorder %s211, %s225
      %p227 = scmp.eq.s32.totalorder %s33, 0
      %p228 = por %p226, %p227
      %s230 = sadd.s32 %s229, 1
      %p233 = scmp.eq.s32.totalorder %s27, 1
      %p234 = scmp.ne.s32.totalorder %s229, %s231
      %p235 = scmp.eq.s32.totalorder %s27, 0
      %p236 = por %p234, %p235
      %p237 = scmp.ne.s32.totalorder %s229, %s231
      %p238 = scmp.eq.s32.totalorder %s32, 1
      %p239 = por %p237, %p238
      %p240 = scmp.ne.s32.totalorder %s231, %s232
      %p241 = scmp.eq.s32.totalorder %s32, 0
      %p242 = por %p240, %p241
      %p243 = scmp.ne.s32.totalorder %s231, %s232
      %p244 = scmp.eq.s32.totalorder %s33, 1
      %p245 = por %p243, %p244
      %p247 = scmp.ne.s32.totalorder %s232, %s246
      %p248 = scmp.eq.s32.totalorder %s33, 0
      %p249 = por %p247, %p248
      %s250 = ssub.s32 %s27, %s34
      %p251 = scmp.eq.s32.totalorder %s250, 0
      %s253 = sadd.s32 %s252, 1
      %s254 = scalar_select %p251, %s252, %s253
      %p257 = pneg %p251
      %p258 = scmp.eq.s32.totalorder %s27, 1
      %p259 = por %p257, %p258
      %p260 = scmp.ne.s32.totalorder %s252, %s255
      %p261 = scmp.eq.s32.totalorder %s27, 0
      %p262 = por %p260, %p261
      %p263 = scmp.ne.s32.totalorder %s252, %s255
      %p264 = scmp.eq.s32.totalorder %s32, 1
      %p265 = por %p263, %p264
      %p266 = scmp.ne.s32.totalorder %s255, %s256
      %p267 = scmp.eq.s32.totalorder %s32, 0
      %p268 = por %p266, %p267
      %p269 = scmp.ne.s32.totalorder %s255, %s256
      %p270 = scmp.eq.s32.totalorder %s33, 1
      %p271 = por %p269, %p270
      %p273 = scmp.ne.s32.totalorder %s256, %s272
      %p274 = scmp.eq.s32.totalorder %s33, 0
      %p275 = por %p273, %p274
      %p276 = scmp.le.s32.totalorder 1, %s27
      %p277 = scmp.lt.s32.totalorder %s27, 3
      %p278 = pnand %p276, %p277
      %p279 = pneg %p278
      // Predicated region
      $region9: #{conv2d_channel_forward.1} parent=5 // pred_check
        _
      $region10: #{conv2d_channel_forward.1} parent=5 // pred_check_branch
        %281 = sbr.rel (%p278) target = $region12
      $region11: #{conv2d_channel_forward.1} parent=5 // pred_region
        %s282 = ssub.s32 %s27, 1
        // Predicated region
        $region13: #{conv2d_channel_forward.1} parent=11 // pred_check
          %p283 = pneg %p74
        $region14: #{conv2d_channel_forward.1} parent=11 // pred_check_branch
          %285 = sbr.rel (%p283) target = $region16
        $region15: #{conv2d_channel_forward.1} parent=11 // pred_region
          %s287 = ssub.s32 256, 256
          %288 = vsyncadd [#allocation6], %s287
          %s289 = sshll.u32 [#allocation5], 4
          %s290 = int_to_ptr.vmem [resolvable:$true] %s289
          %295 = dma.hbm_to_vmem [thread:$0]  %s1, 256, %s290, [#allocation6], 64, 64, 4
        $region16: #{conv2d_channel_forward.1} parent=11 // pred_fallthru
          _
        // Predicated region
        $region17: #{conv2d_channel_forward.1} parent=11 // pred_check
          %p296 = pneg %p95
        $region18: #{conv2d_channel_forward.1} parent=11 // pred_check_branch
          %298 = sbr.rel (%p296) target = $region20
        $region19: #{conv2d_channel_forward.1} parent=11 // pred_region
          %s300 = ssub.s32 512, 512
          %301 = vsyncadd [#allocation6], %s300
          %s302 = sshll.u32 [#allocation7], 4
          %s303 = int_to_ptr.vmem [resolvable:$true] %s302
          %308 = dma.hbm_to_vmem [thread:$0]  %s2, 512, %s303, [#allocation6], 128, 128, 8
        $region20: #{conv2d_channel_forward.1} parent=11 // pred_fallthru
          _
        // Predicated region
        $region21: #{conv2d_channel_forward.1} parent=11 // pred_check
          %p309 = pneg %p116
        $region22: #{conv2d_channel_forward.1} parent=11 // pred_check_branch
          %311 = sbr.rel (%p309) target = $region24
        $region23: #{conv2d_channel_forward.1} parent=11 // pred_region
          %s313 = ssub.s32 512, 512
          %314 = vsyncadd [#allocation9], %s313
          %s315 = sshll.u32 [#allocation8], 4
          %s316 = int_to_ptr.vmem [resolvable:$true] %s315
          %321 = dma.hbm_to_vmem [thread:$0]  %s3, 512, %s316, [#allocation9], 128, 128, 8
        $region24: #{conv2d_channel_forward.1} parent=11 // pred_fallthru
          _
        // Predicated region
        $region25: #{conv2d_channel_forward.1} parent=11 // pred_check
          %p322 = pneg %p137
        $region26: #{conv2d_channel_forward.1} parent=11 // pred_check_branch
          %324 = sbr.rel (%p322) target = $region28
        $region27: #{conv2d_channel_forward.1} parent=11 // pred_region
          %s326 = ssub.s32 64, 64
          %327 = vsyncadd [#allocation9], %s326
          %s329 = sshll.u32 [#allocation10], 4
          %s330 = int_to_ptr.vmem [resolvable:$true] %s329
          %332 = dma.hbm_to_vmem [thread:$0]  %s4, 64, %s330, [#allocation9]
        $region28: #{conv2d_channel_forward.1} parent=11 // pred_fallthru
          _
        // Predicated region
        $region29: #{conv2d_channel_forward.1} parent=11 // pred_check
          %p333 = pneg %p158
        $region30: #{conv2d_channel_forward.1} parent=11 // pred_check_branch
          %335 = sbr.rel (%p333) target = $region32
        $region31: #{conv2d_channel_forward.1} parent=11 // pred_region
          %s337 = ssub.s32 64, 64
          %338 = vsyncadd [#allocation12], %s337
          %s340 = sshll.u32 [#allocation11], 4
          %s341 = int_to_ptr.vmem [resolvable:$true] %s340
          %343 = dma.hbm_to_vmem [thread:$0]  %s5, 64, %s341, [#allocation12]
        $region32: #{conv2d_channel_forward.1} parent=11 // pred_fallthru
          _
        // Predicated region
        $region33: #{conv2d_channel_forward.1} parent=11 // pred_check
          %p344 = pneg %p179
        $region34: #{conv2d_channel_forward.1} parent=11 // pred_check_branch
          %346 = sbr.rel (%p344) target = $region36
        $region35: #{conv2d_channel_forward.1} parent=11 // pred_region
          %s348 = ssub.s32 512, 512
          %349 = vsyncadd [#allocation12], %s348
          %s350 = sshll.u32 [#allocation13], 4
          %s351 = int_to_ptr.vmem [resolvable:$true] %s350
          %356 = dma.hbm_to_vmem [thread:$0]  %s6, 512, %s351, [#allocation12], 128, 128, 8
        $region36: #{conv2d_channel_forward.1} parent=11 // pred_fallthru
          _
        // Predicated region
        $region37: #{conv2d_channel_forward.1} parent=11 // pred_check
          %p357 = pneg %p200
        $region38: #{conv2d_channel_forward.1} parent=11 // pred_check_branch
          %359 = sbr.rel (%p357) target = $region40
        $region39: #{conv2d_channel_forward.1} parent=11 // pred_region
          %s361 = ssub.s32 512, 512
          %362 = vsyncadd [#allocation15], %s361
          %s363 = sshll.u32 [#allocation14], 4
          %s364 = int_to_ptr.vmem [resolvable:$true] %s363
          %369 = dma.hbm_to_vmem [thread:$0]  %s7, 512, %s364, [#allocation15], 128, 128, 8
        $region40: #{conv2d_channel_forward.1} parent=11 // pred_fallthru
          _
        // Predicated region
        $region41: #{conv2d_channel_forward.1} parent=11 // pred_check
          %p370 = pneg %p221
        $region42: #{conv2d_channel_forward.1} parent=11 // pred_check_branch
          %372 = sbr.rel (%p370) target = $region44
        $region43: #{conv2d_channel_forward.1} parent=11 // pred_region
          %s374 = ssub.s32 512, 512
          %375 = vsyncadd [#allocation15], %s374
          %s376 = sshll.u32 [#allocation16], 4
          %s377 = int_to_ptr.vmem [resolvable:$true] %s376
          %382 = dma.hbm_to_vmem [thread:$0]  %s8, 512, %s377, [#allocation15], 128, 128, 8
        $region44: #{conv2d_channel_forward.1} parent=11 // pred_fallthru
          _
        // Predicated region
        $region45: #{conv2d_channel_forward.1} parent=11 // pred_check
          %p383 = pneg %p242
        $region46: #{conv2d_channel_forward.1} parent=11 // pred_check_branch
          %385 = sbr.rel (%p383) target = $region48
        $region47: #{conv2d_channel_forward.1} parent=11 // pred_region
          %s387 = ssub.s32 512, 512
          %388 = vsyncadd [#allocation18], %s387
          %s389 = sshll.u32 [#allocation17], 4
          %s390 = int_to_ptr.vmem [resolvable:$true] %s389
          %395 = dma.hbm_to_vmem [thread:$0]  %s9, 512, %s390, [#allocation18], 128, 128, 8
        $region48: #{conv2d_channel_forward.1} parent=11 // pred_fallthru
          _
      $region12: #{conv2d_channel_forward.1} parent=5 // pred_fallthru
        _
      %p396 = scmp.lt.s32.totalorder %s27, 2
      // Predicated region
      $region49: #{conv2d_channel_forward.1} parent=5 // pred_check
        %p397 = pneg %p396
      $region50: #{conv2d_channel_forward.1} parent=5 // pred_check_branch
        %399 = sbr.rel (%p397) target = $region52
      $region51: #{conv2d_channel_forward.1} parent=5 // pred_region
        // Predicated region
        $region53: #{conv2d_channel_forward.1} parent=51 // pred_check
          %p400 = pneg %p47
        $region54: #{conv2d_channel_forward.1} parent=51 // pred_check_branch
          %402 = sbr.rel (%p400) target = $region56
        $region55: #{conv2d_channel_forward.1} parent=51 // pred_region
          %s403 = sand.u32 %s37, 1
          %s404 = scalar_lea.sflag [#allocation3], %s403
          %s405 = sand.u32 %s37, 1
          %s406 = smul.addr %s405, 32
          %s407 = scalar_lea.vmem [#allocation2], %s406
          %s409 = ssub.s32 512, 512
          %410 = vsyncadd %s404, %s409
          %s411 = smul.addr %s27, 4
          %s412 = smul.addr %s411, 128
          %s413 = scalar_lea.hbm %s0, %s412
          %s414 = sshll.u32 %s407, 4
          %s415 = int_to_ptr.vmem [resolvable:$true] %s414
          %420 = dma.hbm_to_vmem [thread:$0]  %s413, 512, %s415, %s404, 256, 256, 16
        $region56: #{conv2d_channel_forward.1} parent=51 // pred_fallthru
          _
      $region52: #{conv2d_channel_forward.1} parent=5 // pred_fallthru
        _
      %p421 = scmp.le.s32.totalorder 1, %s27
      %p422 = scmp.lt.s32.totalorder %s27, 3
      %p423 = pnand %p421, %p422
      %p424 = pneg %p423
      // Predicated region
      $region57: #{conv2d_channel_forward.1} parent=5 // pred_check
        _
      $region58: #{conv2d_channel_forward.1} parent=5 // pred_check_branch
        %426 = sbr.rel (%p423) target = $region60
      $region59: #{conv2d_channel_forward.1} parent=5 // pred_region
        %s427 = ssub.s32 %s27, 1
        %s428 = sand.u32 %s40, 1
        %s429 = scalar_lea.sflag [#allocation3], %s428
        %s430 = sand.u32 %s40, 1
        %s431 = smul.addr %s430, 32
        %s432 = scalar_lea.vmem [#allocation2], %s431
        // Predicated region
        $region61: #{conv2d_channel_forward.1} parent=59 // pred_check
          %p433 = pneg %p53
        $region62: #{conv2d_channel_forward.1} parent=59 // pred_check_branch
          %435 = sbr.rel (%p433) target = $region64
        $region63: #{conv2d_channel_forward.1} parent=59 // pred_region
          %436 = dma.done %s429, 512
        $region64: #{conv2d_channel_forward.1} parent=59 // pred_fallthru
          _
        // Predicated region
        $region65: #{conv2d_channel_forward.1} parent=59 // pred_check
          %p437 = pneg %p74
        $region66: #{conv2d_channel_forward.1} parent=59 // pred_check_branch
          %439 = sbr.rel (%p437) target = $region68
        $region67: #{conv2d_channel_forward.1} parent=59 // pred_region
          %440 = dma.done [#allocation6], 256
        $region68: #{conv2d_channel_forward.1} parent=59 // pred_fallthru
          _
        // Predicated region
        $region69: #{conv2d_channel_forward.1} parent=59 // pred_check
          %p441 = pneg %p95
        $region70: #{conv2d_channel_forward.1} parent=59 // pred_check_branch
          %443 = sbr.rel (%p441) target = $region72
        $region71: #{conv2d_channel_forward.1} parent=59 // pred_region
          %444 = dma.done [#allocation6], 512
        $region72: #{conv2d_channel_forward.1} parent=59 // pred_fallthru
          _
        // Predicated region
        $region73: #{conv2d_channel_forward.1} parent=59 // pred_check
          %p445 = pneg %p116
        $region74: #{conv2d_channel_forward.1} parent=59 // pred_check_branch
          %447 = sbr.rel (%p445) target = $region76
        $region75: #{conv2d_channel_forward.1} parent=59 // pred_region
          %448 = dma.done [#allocation9], 512
        $region76: #{conv2d_channel_forward.1} parent=59 // pred_fallthru
          _
        // Predicated region
        $region77: #{conv2d_channel_forward.1} parent=59 // pred_check
          %p449 = pneg %p137
        $region78: #{conv2d_channel_forward.1} parent=59 // pred_check_branch
          %451 = sbr.rel (%p449) target = $region80
        $region79: #{conv2d_channel_forward.1} parent=59 // pred_region
          %452 = dma.done [#allocation9], 64
        $region80: #{conv2d_channel_forward.1} parent=59 // pred_fallthru
          _
        // Predicated region
        $region81: #{conv2d_channel_forward.1} parent=59 // pred_check
          %p453 = pneg %p158
        $region82: #{conv2d_channel_forward.1} parent=59 // pred_check_branch
          %455 = sbr.rel (%p453) target = $region84
        $region83: #{conv2d_channel_forward.1} parent=59 // pred_region
          %456 = dma.done [#allocation12], 64
        $region84: #{conv2d_channel_forward.1} parent=59 // pred_fallthru
          _
        // Predicated region
        $region85: #{conv2d_channel_forward.1} parent=59 // pred_check
          %p457 = pneg %p179
        $region86: #{conv2d_channel_forward.1} parent=59 // pred_check_branch
          %459 = sbr.rel (%p457) target = $region88
        $region87: #{conv2d_channel_forward.1} parent=59 // pred_region
          %460 = dma.done [#allocation12], 512
        $region88: #{conv2d_channel_forward.1} parent=59 // pred_fallthru
          _
        // Predicated region
        $region89: #{conv2d_channel_forward.1} parent=59 // pred_check
          %p461 = pneg %p200
        $region90: #{conv2d_channel_forward.1} parent=59 // pred_check_branch
          %463 = sbr.rel (%p461) target = $region92
        $region91: #{conv2d_channel_forward.1} parent=59 // pred_region
          %464 = dma.done [#allocation15], 512
        $region92: #{conv2d_channel_forward.1} parent=59 // pred_fallthru
          _
        // Predicated region
        $region93: #{conv2d_channel_forward.1} parent=59 // pred_check
          %p465 = pneg %p221
        $region94: #{conv2d_channel_forward.1} parent=59 // pred_check_branch
          %467 = sbr.rel (%p465) target = $region96
        $region95: #{conv2d_channel_forward.1} parent=59 // pred_region
          %468 = dma.done [#allocation15], 512
        $region96: #{conv2d_channel_forward.1} parent=59 // pred_fallthru
          _
        // Predicated region
        $region97: #{conv2d_channel_forward.1} parent=59 // pred_check
          %p469 = pneg %p242
        $region98: #{conv2d_channel_forward.1} parent=59 // pred_check_branch
          %471 = sbr.rel (%p469) target = $region100
        $region99: #{conv2d_channel_forward.1} parent=59 // pred_region
          %472 = dma.done [#allocation18], 512
        $region100: #{conv2d_channel_forward.1} parent=59 // pred_fallthru
          _
        %s473 = sand.u32 %s40, 1
        %s474 = scalar_lea.sflag [#allocation3], %s473
        %s475 = sand.u32 %s40, 1
        %s476 = smul.addr %s475, 32
        %s477 = scalar_lea.vmem [#allocation2], %s476
        %p478 = pneg %p53
        %p479 = pneg %p50
        %p480 = pneg %p74
        %p481 = pneg %p71
        %p482 = pneg %p95
        %p483 = pneg %p92
        %p484 = pneg %p116
        %p485 = pneg %p113
        %p486 = pneg %p137
        %p487 = pneg %p134
        %p488 = pneg %p158
        %p489 = pneg %p155
        %p490 = pneg %p179
        %p491 = pneg %p176
        %p492 = pneg %p200
        %p493 = pneg %p197
        %p494 = pneg %p221
        %p495 = pneg %p218
        %p496 = pneg %p242
        %p497 = pneg %p239
        %p498 = pneg %p268
        %p499 = pneg %p265
        %s500 = sand.u32 %s255, 1
        %s501 = scalar_lea.sflag [#allocation4], %s500
        %s502 = sand.u32 %s255, 1
        %s503 = smul.addr %s502, 64
        %s504 = scalar_lea.vmem [#allocation19], %s503
        %v506 = vld [vmem:[%s432] sm:$0xff]
        %v507 = vld [vmem:[%s432 + $0x8] sm:$0xff]
        %v508 = vld [vmem:[%s432 + $0x10] sm:$0xff]
        %v509 = vld [vmem:[%s432 + $0x18] sm:$0xff]
        %v510 = vpack.c.bf16 %v508, %v506
        %v511 = vpack.c.bf16 %v509, %v507
        %v512 = vld [vmem:[#allocation5] sm:$0xf]
        %v513 = vld [vmem:[#allocation5 + $0x4] sm:$0xf]
        %v514 = vld [vmem:[#allocation5 + $0x8] sm:$0xf]
        %v515 = vld [vmem:[#allocation5 + $0xc] sm:$0xf]
        %v520 = vunpack.c.l.b16 %v512
        %v521 = vunpack.c.l.b16 %v513
        %v522 = vunpack.c.l.b16 %v514
        %v523 = vunpack.c.l.b16 %v515
        %v524 = vpack.c.b16 %v521, %v520
        %v525 = vpack.c.b16 %v523, %v522
        %vm526 = vcmask 130048
        %v528 = vsel %vm526, %v524, 0
        %v531 = vsel %vm526, %v525, 0
        %533 = vmatprep.subr.bf16.mxu0 %v511
        %534 = vmatpush1.bf16.msra.mxu0 %v510
        %535 = vmatprep.subr.bf16.mxu0 0
        %536 = vmatpush1.bf16.msra.mxu0 0
        %537 = vmatprep.subr.bf16.mxu0 0
        %538 = vmatpush1.bf16.msra.mxu0 0
        %539 = vmatprep.subr.bf16.mxu0 0
        %540 = vmatpush1.bf16.msra.mxu0 0
        %541 = vmatprep.subr.bf16.mxu0 0
        %542 = vmatpush1.bf16.msra.mxu0 0
        %543 = vmatprep.subr.bf16.mxu0 0
        %544 = vmatpush1.bf16.msra.mxu0 0
        %545 = vmatprep.subr.bf16.mxu0 0
        %546 = vmatpush1.bf16.msra.mxu0 0
        %547 = vmatprep.subr.bf16.mxu0 0
        %548 = vmatpush1.bf16.msra.mxu0 0
        %549 = vmatprep.subr.bf16.mxu0 0
        %550 = vmatpush1.bf16.msra.mxu0 0
        %551 = vmatprep.subr.bf16.mxu0 0
        %552 = vmatpush1.bf16.msra.mxu0 0
        %553 = vmatprep.subr.bf16.mxu0 0
        %554 = vmatpush1.bf16.msra.mxu0 0
        %555 = vmatprep.subr.bf16.mxu0 0
        %556 = vmatpush1.bf16.msra.mxu0 0
        %557 = vmatprep.subr.bf16.mxu0 0
        %558 = vmatpush1.bf16.msra.mxu0 0
        %559 = vmatprep.subr.bf16.mxu0 0
        %560 = vmatpush1.bf16.msra.mxu0 0
        %561 = vmatprep.subr.bf16.mxu0 0
        %562 = vmatpush1.bf16.msra.mxu0 0
        %563 = vmatprep.subr.bf16.mxu0 0
        %564 = vmatpush1.bf16.msra.mxu0 0
        %565 = vmatprep.mubr.bf16.mxu0 0
        %566 = vmatmul.mubr.bf16.gmra.mrb[0].mxu0 %v528
        %v567 = vpop.f32.mrb[0].mxu0
        %v568 = vadd.f32 0.0, %v567
        %v569 = vpop.f32.mrb[0].mxu0
        %v570 = vadd.f32 0.0, %v569
        %v571 = vpop.f32.mrb[0].mxu0
        %v572 = vadd.f32 0.0, %v571
        %v573 = vpop.f32.mrb[0].mxu0
        %v574 = vadd.f32 0.0, %v573
        %575 = vmatprep.mubr.bf16.mxu0 0
        %576 = vmatmul.mubr.bf16.gmra.mrb[0].mxu0 %v531
        %v577 = vpop.f32.mrb[0].mxu0
        %v578 = vadd.f32 0.0, %v577
        %v579 = vpop.f32.mrb[0].mxu0
        %v580 = vadd.f32 0.0, %v579
        %v581 = vpop.f32.mrb[0].mxu0
        %v582 = vadd.f32 0.0, %v581
        %v583 = vpop.f32.mrb[0].mxu0
        %v584 = vadd.f32 0.0, %v583
        %585 = vdwg.mxu0
        %v586 = vld [vmem:[#allocation7] sm:$0xff]
        %v587 = vld [vmem:[#allocation7 + $0x8] sm:$0xff]
        %v588 = vld [vmem:[#allocation7 + $0x10] sm:$0xff]
        %v589 = vld [vmem:[#allocation7 + $0x18] sm:$0xff]
        %591 = vset.pattern.permute.xlu0 0
        %592 = vperm.xlu0 %591, %v586
        %v593 = vpop.permute.xlu0 %592
        %596 = vset.pattern.permute.xlu0 0
        %597 = vperm.xlu0 %596, %v587
        %v598 = vpop.permute.xlu0 %597
        %601 = vset.pattern.permute.xlu0 0
        %602 = vperm.xlu0 %601, %v588
        %v603 = vpop.permute.xlu0 %602
        %606 = vset.pattern.permute.xlu0 0
        %607 = vperm.xlu0 %606, %v589
        %v608 = vpop.permute.xlu0 %607
        %v610 = vmul.f32 %v568, %v593
        %v611 = vmul.f32 %v570, %v593
        %v612 = vmul.f32 %v572, %v598
        %v613 = vmul.f32 %v574, %v598
        %v614 = vmul.f32 %v578, %v603
        %v615 = vmul.f32 %v580, %v603
        %v616 = vmul.f32 %v582, %v608
        %v617 = vmul.f32 %v584, %v608
        %v618 = vld [vmem:[#allocation8] sm:$0xff]
        %v619 = vld [vmem:[#allocation8 + $0x8] sm:$0xff]
        %v620 = vld [vmem:[#allocation8 + $0x10] sm:$0xff]
        %v621 = vld [vmem:[#allocation8 + $0x18] sm:$0xff]
        %623 = vset.pattern.permute.xlu0 0
        %624 = vperm.xlu0 %623, %v618
        %v625 = vpop.permute.xlu0 %624
        %628 = vset.pattern.permute.xlu0 0
        %629 = vperm.xlu0 %628, %v619
        %v630 = vpop.permute.xlu0 %629
        %633 = vset.pattern.permute.xlu0 0
        %634 = vperm.xlu0 %633, %v620
        %v635 = vpop.permute.xlu0 %634
        %638 = vset.pattern.permute.xlu0 0
        %639 = vperm.xlu0 %638, %v621
        %v640 = vpop.permute.xlu0 %639
        %v642 = vadd.f32 %v610, %v625
        %v643 = vadd.f32 %v611, %v625
        %v644 = vadd.f32 %v612, %v630
        %v645 = vadd.f32 %v613, %v630
        %v646 = vadd.f32 %v614, %v635
        %v647 = vadd.f32 %v615, %v635
        %v648 = vadd.f32 %v616, %v640
        %v649 = vadd.f32 %v617, %v640
        %vm650 = vcmp.gt.f32.partialorder %v642, 0.0
        %vm651 = vcmp.gt.f32.partialorder %v643, 0.0
        %vm652 = vcmp.gt.f32.partialorder %v644, 0.0
        %vm653 = vcmp.gt.f32.partialorder %v645, 0.0
        %vm654 = vcmp.gt.f32.partialorder %v646, 0.0
        %vm655 = vcmp.gt.f32.partialorder %v647, 0.0
        %vm656 = vcmp.gt.f32.partialorder %v648, 0.0
        %vm657 = vcmp.gt.f32.partialorder %v649, 0.0
        %v658 = vmul.f32 %v642, 0.01
        %v659 = vmul.f32 %v643, 0.01
        %v660 = vmul.f32 %v644, 0.01
        %v661 = vmul.f32 %v645, 0.01
        %v662 = vmul.f32 %v646, 0.01
        %v663 = vmul.f32 %v647, 0.01
        %v664 = vmul.f32 %v648, 0.01
        %v665 = vmul.f32 %v649, 0.01
        %v666 = vsel %vm650, %v642, %v658
        %v667 = vsel %vm651, %v643, %v659
        %v668 = vsel %vm652, %v644, %v660
        %v669 = vsel %vm653, %v645, %v661
        %v670 = vsel %vm654, %v646, %v662
        %v671 = vsel %vm655, %v647, %v663
        %v672 = vsel %vm656, %v648, %v664
        %v673 = vsel %vm657, %v649, %v665
        %v674 = vadd.f32 %v666, %v667
        %675 = vadd.xlane.f32.xlu0 %v674
        %v676 = vpop.xlane.xlu0 %675
        %v677 = vadd.f32 %v668, %v669
        %678 = vadd.xlane.f32.xlu0 %v677
        %v679 = vpop.xlane.xlu0 %678
        %v680 = vadd.f32 %v670, %v671
        %681 = vadd.xlane.f32.xlu0 %v680
        %v682 = vpop.xlane.xlu0 %681
        %v683 = vadd.f32 %v672, %v673
        %684 = vadd.xlane.f32.xlu0 %v683
        %v685 = vpop.xlane.xlu0 %684
        %v686 = vmul.f32 %v676, 0.00390625
        %v687 = vmul.f32 %v679, 0.00390625
        %v688 = vmul.f32 %v682, 0.00390625
        %v689 = vmul.f32 %v685, 0.00390625
        %v690 = vld [vmem:[#allocation10] sm:$0xf]
        %v691 = vld [vmem:[#allocation11] sm:$0xf]
        %vm692 = vcmask 261120
        %v694 = vsel %vm692, %v690, 0
        %696 = vmatprep.subr.mxu0 0.0
        %697 = vmatpush1.msra.mxu0 %v686
        %698 = vmatprep.subr.mxu0 0.0
        %699 = vmatpush1.msra.mxu0 %v687
        %700 = vmatprep.subr.mxu0 0.0
        %701 = vmatpush1.msra.mxu0 %v688
        %702 = vmatprep.subr.mxu0 0.0
        %703 = vmatpush1.msra.mxu0 %v689
        %704 = vmatprep.subr.mxu0 0.0
        %705 = vmatpush1.msra.mxu0 0.0
        %706 = vmatprep.subr.mxu0 0.0
        %707 = vmatpush1.msra.mxu0 0.0
        %708 = vmatprep.subr.mxu0 0.0
        %709 = vmatpush1.msra.mxu0 0.0
        %710 = vmatprep.subr.mxu0 0.0
        %711 = vmatpush1.msra.mxu0 0.0
        %712 = vmatprep.subr.mxu0 0.0
        %713 = vmatpush1.msra.mxu0 0.0
        %714 = vmatprep.subr.mxu0 0.0
        %715 = vmatpush1.msra.mxu0 0.0
        %716 = vmatprep.subr.mxu0 0.0
        %717 = vmatpush1.msra.mxu0 0.0
        %718 = vmatprep.subr.mxu0 0.0
        %719 = vmatpush1.msra.mxu0 0.0
        %720 = vmatprep.subr.mxu0 0.0
        %721 = vmatpush1.msra.mxu0 0.0
        %722 = vmatprep.subr.mxu0 0.0
        %723 = vmatpush1.msra.mxu0 0.0
        %724 = vmatprep.subr.mxu0 0.0
        %725 = vmatpush1.msra.mxu0 0.0
        %726 = vmatprep.subr.mxu0 0.0
        %727 = vmatpush1.msra.mxu0 0.0
        %728 = vmatprep.subr.mxu0 0.0
        %729 = vmatpush1.msra.mxu0 0.0
        %730 = vmatprep.subr.mxu0 0.0
        %731 = vmatpush1.msra.mxu0 0.0
        %732 = vmatprep.subr.mxu0 0.0
        %733 = vmatpush1.msra.mxu0 0.0
        %734 = vmatprep.subr.mxu0 0.0
        %735 = vmatpush1.msra.mxu0 0.0
        %736 = vmatprep.subr.mxu0 0.0
        %737 = vmatpush1.msra.mxu0 0.0
        %738 = vmatprep.subr.mxu0 0.0
        %739 = vmatpush1.msra.mxu0 0.0
        %740 = vmatprep.subr.mxu0 0.0
        %741 = vmatpush1.msra.mxu0 0.0
        %742 = vmatprep.subr.mxu0 0.0
        %743 = vmatpush1.msra.mxu0 0.0
        %744 = vmatprep.subr.mxu0 0.0
        %745 = vmatpush1.msra.mxu0 0.0
        %746 = vmatprep.subr.mxu0 0.0
        %747 = vmatpush1.msra.mxu0 0.0
        %748 = vmatprep.subr.mxu0 0.0
        %749 = vmatpush1.msra.mxu0 0.0
        %750 = vmatprep.subr.mxu0 0.0
        %751 = vmatpush1.msra.mxu0 0.0
        %752 = vmatprep.subr.mxu0 0.0
        %753 = vmatpush1.msra.mxu0 0.0
        %754 = vmatprep.subr.mxu0 0.0
        %755 = vmatpush1.msra.mxu0 0.0
        %756 = vmatprep.subr.mxu0 0.0
        %757 = vmatpush1.msra.mxu0 0.0
        %758 = vmatprep.subr.mxu0 0.0
        %759 = vmatpush1.msra.mxu0 0.0
        %760 = vmatprep.mubr.f32.mxu0 0.0
        %761 = vmatmul.mubr.f32.gmra.mrb[0].mxu0 %v694
        %v762 = vpop.f32.mrb[0].mxu0
        %v763 = vadd.f32 %v691, %v762
        %v764 = vpop.f32.mrb[0].mxu0
        %765 = vdwg.mxu0
        %vm766 = vcmp.gt.f32.partialorder %v763, 0.0
        %v767 = vmul.f32 %v763, 0.01
        %v768 = vsel %vm766, %v763, %v767
        %v769 = vld [vmem:[#allocation13] sm:$0xff]
        %v770 = vld [vmem:[#allocation13 + $0x8] sm:$0xff]
        %v771 = vld [vmem:[#allocation13 + $0x10] sm:$0xff]
        %v772 = vld [vmem:[#allocation13 + $0x18] sm:$0xff]
        %v773 = vld [vmem:[#allocation14] sm:$0xff]
        %v774 = vld [vmem:[#allocation14 + $0x8] sm:$0xff]
        %v775 = vld [vmem:[#allocation14 + $0x10] sm:$0xff]
        %v776 = vld [vmem:[#allocation14 + $0x18] sm:$0xff]
        %vm777 = vcmask 31744
        %v779 = vsel %vm777, %v769, 0
        %v782 = vsel %vm777, %v770, 0
        %v785 = vsel %vm777, %v771, 0
        %v788 = vsel %vm777, %v772, 0
        %vm790 = vcmask 1043456
        %v792 = vsel %vm790, %v768, 0
        %794 = vmatprep.subr.mxu0 0.0
        %795 = vmatpush1.msra.mxu0 %v792
        %796 = vmatprep.subr.mxu0 0.0
        %797 = vmatpush1.msra.mxu0 0.0
        %798 = vmatprep.subr.mxu0 0.0
        %799 = vmatpush1.msra.mxu0 0.0
        %800 = vmatprep.subr.mxu0 0.0
        %801 = vmatpush1.msra.mxu0 0.0
        %802 = vmatprep.subr.mxu0 0.0
        %803 = vmatpush1.msra.mxu0 0.0
        %804 = vmatprep.subr.mxu0 0.0
        %805 = vmatpush1.msra.mxu0 0.0
        %806 = vmatprep.subr.mxu0 0.0
        %807 = vmatpush1.msra.mxu0 0.0
        %808 = vmatprep.subr.mxu0 0.0
        %809 = vmatpush1.msra.mxu0 0.0
        %810 = vmatprep.subr.mxu0 0.0
        %811 = vmatpush1.msra.mxu0 0.0
        %812 = vmatprep.subr.mxu0 0.0
        %813 = vmatpush1.msra.mxu0 0.0
        %814 = vmatprep.subr.mxu0 0.0
        %815 = vmatpush1.msra.mxu0 0.0
        %816 = vmatprep.subr.mxu0 0.0
        %817 = vmatpush1.msra.mxu0 0.0
        %818 = vmatprep.subr.mxu0 0.0
        %819 = vmatpush1.msra.mxu0 0.0
        %820 = vmatprep.subr.mxu0 0.0
        %821 = vmatpush1.msra.mxu0 0.0
        %822 = vmatprep.subr.mxu0 0.0
        %823 = vmatpush1.msra.mxu0 0.0
        %824 = vmatprep.subr.mxu0 0.0
        %825 = vmatpush1.msra.mxu0 0.0
        %826 = vmatprep.subr.mxu0 0.0
        %827 = vmatpush1.msra.mxu0 0.0
        %828 = vmatprep.subr.mxu0 0.0
        %829 = vmatpush1.msra.mxu0 0.0
        %830 = vmatprep.subr.mxu0 0.0
        %831 = vmatpush1.msra.mxu0 0.0
        %832 = vmatprep.subr.mxu0 0.0
        %833 = vmatpush1.msra.mxu0 0.0
        %834 = vmatprep.subr.mxu0 0.0
        %835 = vmatpush1.msra.mxu0 0.0
        %836 = vmatprep.subr.mxu0 0.0
        %837 = vmatpush1.msra.mxu0 0.0
        %838 = vmatprep.subr.mxu0 0.0
        %839 = vmatpush1.msra.mxu0 0.0
        %840 = vmatprep.subr.mxu0 0.0
        %841 = vmatpush1.msra.mxu0 0.0
        %842 = vmatprep.subr.mxu0 0.0
        %843 = vmatpush1.msra.mxu0 0.0
        %844 = vmatprep.subr.mxu0 0.0
        %845 = vmatpush1.msra.mxu0 0.0
        %846 = vmatprep.subr.mxu0 0.0
        %847 = vmatpush1.msra.mxu0 0.0
        %848 = vmatprep.subr.mxu0 0.0
        %849 = vmatpush1.msra.mxu0 0.0
        %850 = vmatprep.subr.mxu0 0.0
        %851 = vmatpush1.msra.mxu0 0.0
        %852 = vmatprep.subr.mxu0 0.0
        %853 = vmatpush1.msra.mxu0 0.0
        %854 = vmatprep.subr.mxu0 0.0
        %855 = vmatpush1.msra.mxu0 0.0
        %856 = vmatprep.subr.mxu0 0.0
        %857 = vmatpush1.msra.mxu0 0.0
        %858 = vmatprep.mubr.f32.mxu0 0.0
        %859 = vmatmul.mubr.f32.gmra.mrb[0].mxu0 %v779
        %v860 = vpop.f32.mrb[0].mxu0
        %v861 = vadd.f32 %v773, %v860
        %v862 = vpop.f32.mrb[0].mxu0
        %863 = vmatprep.mubr.f32.mxu0 0.0
        %864 = vmatmul.mubr.f32.gmra.mrb[0].mxu0 %v782
        %v865 = vpop.f32.mrb[0].mxu0
        %v866 = vadd.f32 %v774, %v865
        %v867 = vpop.f32.mrb[0].mxu0
        %868 = vmatprep.mubr.f32.mxu0 0.0
        %869 = vmatmul.mubr.f32.gmra.mrb[0].mxu0 %v785
        %v870 = vpop.f32.mrb[0].mxu0
        %v871 = vadd.f32 %v775, %v870
        %v872 = vpop.f32.mrb[0].mxu0
        %873 = vmatprep.mubr.f32.mxu0 0.0
        %874 = vmatmul.mubr.f32.gmra.mrb[0].mxu0 %v788
        %v875 = vpop.f32.mrb[0].mxu0
        %v876 = vadd.f32 %v776, %v875
        %v877 = vpop.f32.mrb[0].mxu0
        %878 = vdwg.mxu0
        %v879 = vxor.u32 %v861, 2147483648
        %v880 = vxor.u32 %v866, 2147483648
        %v881 = vxor.u32 %v871, 2147483648
        %v882 = vxor.u32 %v876, 2147483648
        %v883 = vmul.f32 %v879, 1.442695
        %v884 = vpow.pop %v883
        %v885 = vmul.f32 %v880, 1.442695
        %v886 = vpow.pop %v885
        %v887 = vmul.f32 %v881, 1.442695
        %v888 = vpow.pop %v887
        %v889 = vmul.f32 %v882, 1.442695
        %v890 = vpow.pop %v889
        %v891 = vadd.f32 %v884, 1.0
        %v892 = vadd.f32 %v886, 1.0
        %v893 = vadd.f32 %v888, 1.0
        %v894 = vadd.f32 %v890, 1.0
        %v895 = vrcp.pop %v891
        %v896 = vmul.f32 1.0, %v895
        %v897 = vrcp.pop %v892
        %v898 = vmul.f32 1.0, %v897
        %v899 = vrcp.pop %v893
        %v900 = vmul.f32 1.0, %v899
        %v901 = vrcp.pop %v894
        %v902 = vmul.f32 1.0, %v901
        %v903 = vld [vmem:[#allocation16] sm:$0xff]
        %v904 = vld [vmem:[#allocation16 + $0x8] sm:$0xff]
        %v905 = vld [vmem:[#allocation16 + $0x10] sm:$0xff]
        %v906 = vld [vmem:[#allocation16 + $0x18] sm:$0xff]
        %v907 = vmul.f32 %v896, %v903
        %v908 = vmul.f32 %v898, %v904
        %v909 = vmul.f32 %v900, %v905
        %v910 = vmul.f32 %v902, %v906
        %912 = vset.pattern.permute.xlu0 0
        %913 = vperm.xlu0 %912, %v907
        %v914 = vpop.permute.xlu0 %913
        %917 = vset.pattern.permute.xlu0 0
        %918 = vperm.xlu0 %917, %v908
        %v919 = vpop.permute.xlu0 %918
        %922 = vset.pattern.permute.xlu0 0
        %923 = vperm.xlu0 %922, %v909
        %v924 = vpop.permute.xlu0 %923
        %927 = vset.pattern.permute.xlu0 0
        %928 = vperm.xlu0 %927, %v910
        %v929 = vpop.permute.xlu0 %928
        %v931 = vmul.f32 %v666, %v914
        %v932 = vmul.f32 %v667, %v914
        %v933 = vmul.f32 %v668, %v919
        %v934 = vmul.f32 %v669, %v919
        %v935 = vmul.f32 %v670, %v924
        %v936 = vmul.f32 %v671, %v924
        %v937 = vmul.f32 %v672, %v929
        %v938 = vmul.f32 %v673, %v929
        %v939 = vld [vmem:[#allocation17] sm:$0xff]
        %v940 = vld [vmem:[#allocation17 + $0x8] sm:$0xff]
        %v941 = vld [vmem:[#allocation17 + $0x10] sm:$0xff]
        %v942 = vld [vmem:[#allocation17 + $0x18] sm:$0xff]
        %944 = vset.pattern.permute.xlu0 0
        %945 = vperm.xlu0 %944, %v939
        %v946 = vpop.permute.xlu0 %945
        %949 = vset.pattern.permute.xlu0 0
        %950 = vperm.xlu0 %949, %v940
        %v951 = vpop.permute.xlu0 %950
        %954 = vset.pattern.permute.xlu0 0
        %955 = vperm.xlu0 %954, %v941
        %v956 = vpop.permute.xlu0 %955
        %959 = vset.pattern.permute.xlu0 0
        %960 = vperm.xlu0 %959, %v942
        %v961 = vpop.permute.xlu0 %960
        %v963 = vadd.f32 %v931, %v946
        %v964 = vadd.f32 %v932, %v946
        %v965 = vadd.f32 %v933, %v951
        %v966 = vadd.f32 %v934, %v951
        %v967 = vadd.f32 %v935, %v956
        %v968 = vadd.f32 %v936, %v956
        %v969 = vadd.f32 %v937, %v961
        %v970 = vadd.f32 %v938, %v961
        %vm971 = vcmp.gt.f32.partialorder %v963, 0.0
        %vm972 = vcmp.gt.f32.partialorder %v964, 0.0
        %vm973 = vcmp.gt.f32.partialorder %v965, 0.0
        %vm974 = vcmp.gt.f32.partialorder %v966, 0.0
        %vm975 = vcmp.gt.f32.partialorder %v967, 0.0
        %vm976 = vcmp.gt.f32.partialorder %v968, 0.0
        %vm977 = vcmp.gt.f32.partialorder %v969, 0.0
        %vm978 = vcmp.gt.f32.partialorder %v970, 0.0
        %v979 = vmul.f32 %v963, 0.01
        %v980 = vmul.f32 %v964, 0.01
        %v981 = vmul.f32 %v965, 0.01
        %v982 = vmul.f32 %v966, 0.01
        %v983 = vmul.f32 %v967, 0.01
        %v984 = vmul.f32 %v968, 0.01
        %v985 = vmul.f32 %v969, 0.01
        %v986 = vmul.f32 %v970, 0.01
        %v987 = vsel %vm971, %v963, %v979
        %v988 = vsel %vm972, %v964, %v980
        %v989 = vsel %vm973, %v965, %v981
        %v990 = vsel %vm974, %v966, %v982
        %v991 = vsel %vm975, %v967, %v983
        %v992 = vsel %vm976, %v968, %v984
        %v993 = vsel %vm977, %v969, %v985
        %v994 = vsel %vm978, %v970, %v986
        %995 = vst [vmem:[%s504] sm:$0xff] %v987
        %996 = vst [vmem:[%s504 + $0x8] sm:$0xff] %v988
        %997 = vst [vmem:[%s504 + $0x10] sm:$0xff] %v989
        %998 = vst [vmem:[%s504 + $0x18] sm:$0xff] %v990
        %999 = vst [vmem:[%s504 + $0x20] sm:$0xff] %v991
        %1000 = vst [vmem:[%s504 + $0x28] sm:$0xff] %v992
        %1001 = vst [vmem:[%s504 + $0x30] sm:$0xff] %v993
        %1002 = vst [vmem:[%s504 + $0x38] sm:$0xff] %v994
        %s1003 = sand.u32 %s255, 1
        %s1004 = scalar_lea.sflag [#allocation4], %s1003
        %s1005 = sand.u32 %s255, 1
        %s1006 = smul.addr %s1005, 64
        %s1007 = scalar_lea.vmem [#allocation19], %s1006
        // Predicated region
        $region101: #{conv2d_channel_forward.1} parent=59 // pred_check
          %p1008 = pneg %p265
        $region102: #{conv2d_channel_forward.1} parent=59 // pred_check_branch
          %1010 = sbr.rel (%p1008) target = $region104
        $region103: #{conv2d_channel_forward.1} parent=59 // pred_region
          %s1012 = ssub.s32 1024, 1024
          %1013 = vsyncadd %s1004, %s1012
          %s1014 = smul.addr %s32, 8
          %s1015 = smul.addr %s1014, 128
          %s1016 = scalar_lea.hbm %s10, %s1015
          %s1017 = sshll.u32 %s1007, 4
          %s1018 = int_to_ptr.vmem [resolvable:$true] %s1017
          %1023 = dma.vmem_to_hbm [thread:$0]  %s1018, 1024, %s1016, %s1004, 256, 256, 16
        $region104: #{conv2d_channel_forward.1} parent=59 // pred_fallthru
          _
      $region60: #{conv2d_channel_forward.1} parent=5 // pred_fallthru
        _
      %p1024 = scmp.le.s32.totalorder 2, %s27
      // Predicated region
      $region105: #{conv2d_channel_forward.1} parent=5 // pred_check
        %p1025 = pneg %p1024
      $region106: #{conv2d_channel_forward.1} parent=5 // pred_check_branch
        %1027 = sbr.rel (%p1025) target = $region108
      $region107: #{conv2d_channel_forward.1} parent=5 // pred_region
        %s1028 = ssub.s32 %s27, 2
        // Predicated region
        $region109: #{conv2d_channel_forward.1} parent=107 // pred_check
          %p1029 = pneg %p271
        $region110: #{conv2d_channel_forward.1} parent=107 // pred_check_branch
          %1031 = sbr.rel (%p1029) target = $region112
        $region111: #{conv2d_channel_forward.1} parent=107 // pred_region
          %s1032 = sand.u32 %s256, 1
          %s1033 = scalar_lea.sflag [#allocation4], %s1032
          %s1034 = sand.u32 %s256, 1
          %s1035 = smul.addr %s1034, 64
          %s1036 = scalar_lea.vmem [#allocation19], %s1035
          %1037 = dma.done %s1033, 1024
        $region112: #{conv2d_channel_forward.1} parent=107 // pred_fallthru
          _
      $region108: #{conv2d_channel_forward.1} parent=5 // pred_fallthru
        _
    $region6: #{conv2d_channel_forward.1} parent=1 // loop_footer
      %s31 = sadd.s32 1, %s27
    $region7: #{conv2d_channel_forward.1} parent=1 // loop_footer_branch
      %26 = sbr.rel target = $region3
    $region8: #{conv2d_channel_forward.1} parent=1 // loop_exit
      _
    %1038 = vsyncpa [#allocation3], 1
    %s1039 = scalar_lea.sflag [#allocation3], 1
    %1040 = vsyncpa %s1039, 1
    %1041 = vsyncpa [#allocation6], 1
    %1042 = vsyncpa [#allocation9], 1
    %1043 = vsyncpa [#allocation12], 1
    %1044 = vsyncpa [#allocation15], 1
    %1045 = vsyncpa [#allocation18], 1
    %1046 = vsyncpa [#allocation4], 1
    %s1047 = scalar_lea.sflag [#allocation4], 1
    %1048 = vsyncpa %s1047, 1

</llo_original>
